<compile_context>
chip_gen: v5e
topology: v5e:2x2
jax: 0.10.0
libtpu: 0.0.40
codegen_flags: <defaults>
</compile_context>

<pallas_src>
import functools

import jax
import jax.numpy as jnp
from jax.experimental import pallas as pl
from jax.experimental.pallas import tpu as pltpu


def _round_up(x, m):
    return ((x + m - 1) // m) * m


def _router_kernel(x_ref, w1_ref, b1_ref, w2_ref, b2m_ref,
                   wi1_ref, bi1_ref, wi2_ref, bi2_ref,
                   probs_ref, idx_ref, aux_ref, *, top_k):
    x = x_ref[...]                                            # [TN, H] bf16

    # ---- router MLP: Linear -> ReLU -> Linear (MXU, f32 accumulation) ----
    h = jnp.dot(x, w1_ref[...], preferred_element_type=jnp.float32) + b1_ref[...]
    h = jnp.maximum(h, 0.0)
    # 1/temperature and the expert mask are pre-folded into w2_ref / b2m_ref;
    # padded expert columns carry -1e9 in b2m_ref so they never win.
    logits = jnp.dot(h.astype(x.dtype), w2_ref[...],
                     preferred_element_type=jnp.float32) + b2m_ref[...]

    # ---- softmax over (padded) experts ----
    m = jnp.max(logits, axis=-1, keepdims=True)
    e = jnp.exp(logits - m)
    denom = jnp.sum(e, axis=-1, keepdims=True)
    probs = e * pl.reciprocal(denom, approx=True)             # [TN, EP]

    # ---- importance head: Linear -> ReLU -> Linear(H/2 -> 1) -> Sigmoid ----
    hi = jnp.dot(x, wi1_ref[...], preferred_element_type=jnp.float32) + bi1_ref[...]
    hi = jnp.maximum(hi, 0.0)
    # Degenerate (1 output column) matmul done as VPU multiply + lane reduce.
    z = jnp.sum(hi * wi2_ref[...], axis=-1, keepdims=True) + bi2_ref[...]
    importance = pl.reciprocal(1.0 + jnp.exp(-z), approx=False)   # [TN, 1]

    # ---- importance-reweighted routing weights, renormalized over experts ----
    weighted = probs * importance
    wsum = jnp.sum(weighted, axis=-1, keepdims=True)
    routing = weighted * pl.reciprocal(wsum, approx=True)
    probs_ref[...] = routing.astype(probs_ref.dtype)

    # ---- top-k on the pre-importance softmax (torch.topk semantics) ----
    tn, ep = probs.shape
    col = jax.lax.broadcasted_iota(jnp.int32, (tn, ep), 1)
    remaining = probs
    vals, idxs = [], []
    for _ in range(top_k):
        v = jnp.max(remaining, axis=-1, keepdims=True)                # [TN, 1]
        i = jnp.min(jnp.where(remaining == v, col, ep),
                    axis=-1, keepdims=True)                           # lowest-index tie break
        vals.append(v)
        idxs.append(i)
        remaining = jnp.where(col == i, -jnp.inf, remaining)

    top_sum = vals[0]
    for v in vals[1:]:
        top_sum = top_sum + v
    inv = pl.reciprocal(top_sum, approx=True)

    # Lane-dense output slabs: idx slab holds the k indices in lanes 0..k-1;
    # aux slab holds the k renormalized weights in lanes 0..k-1 and the token
    # importance in every remaining lane (wrapper slices lane k).
    kp = idx_ref.shape[-1]
    lane = jax.lax.broadcasted_iota(jnp.int32, (tn, kp), 1)
    idx_full = jnp.zeros((tn, kp), jnp.int32)
    aux_full = jnp.broadcast_to(importance, (tn, kp))
    for j in range(top_k):
        idx_full = jnp.where(lane == j, idxs[j], idx_full)
        aux_full = jnp.where(lane == j, vals[j] * inv, aux_full)
    idx_ref[...] = idx_full
    aux_ref[...] = aux_full.astype(aux_ref.dtype)


def importance_aware_router_forward(x, params, *, top_k=2, temperature=1.0,
                                     expert_mask=None):
    """x: [B, S, H] float32.

    Returns:
      routing_weights [B, S, E]  (importance-reweighted, renormalized)
      expert_indices  [B, S, K]  int32
      top_k_weights   [B, S, K]
      importance      [B, S, 1]
    """
    b, s, h = x.shape
    w1, b1, w2, b2 = params["w1"], params["b1"], params["w2"], params["b2"]
    wi1, bi1, wi2, bi2 = (params["wi1"], params["bi1"],
                          params["wi2"], params["bi2"])
    e = w2.shape[1]
    h2 = wi1.shape[1]
    top_k = int(top_k)
    n = b * s

    # Token tiling: stream x / outputs over a 1-D grid, weights stay resident.
    tile_n = min(512, _round_up(n, 8))
    n_pad = _round_up(n, tile_n)
    grid = (n_pad // tile_n,)

    # Lane padding: expert axis -> ep, top-k/importance slab -> kp.
    ep = _round_up(e, 128)
    kp = _round_up(top_k + 1, 128)

    inv_t = 1.0 / float(temperature)
    if expert_mask is None:
        mask = jnp.zeros((e,), jnp.float32)
    else:
        mask = expert_mask.reshape(e).astype(jnp.float32)

    # Fold 1/T into w2/b2 and the mask into the logit bias; pad experts with
    # -1e9 so softmax/top-k can never select a pad column.
    w2p = jnp.zeros((h, ep), jnp.float32).at[:, :e].set(
        w2.astype(jnp.float32) * inv_t)
    b2m = jnp.full((1, ep), -1e9, jnp.float32).at[:, :e].set(
        (b2.astype(jnp.float32) * inv_t + mask).reshape(1, e))

    # bf16 MXU inputs (f32 accumulation in-kernel); biases / tail math in f32.
    x2 = jnp.pad(x.reshape(n, h), ((0, n_pad - n), (0, 0))).astype(jnp.bfloat16)
    w1b = w1.astype(jnp.bfloat16)
    w2b = w2p.astype(jnp.bfloat16)
    wi1b = wi1.astype(jnp.bfloat16)
    b1_2d = b1.reshape(1, h).astype(jnp.float32)
    bi1_2d = bi1.reshape(1, h2).astype(jnp.float32)
    wi2_row = wi2.reshape(1, h2).astype(jnp.float32)   # (H2, 1) -> row vector
    bi2_2d = bi2.reshape(1, 1).astype(jnp.float32)

    kernel = functools.partial(_router_kernel, top_k=top_k)

    resident = lambda shape: pl.BlockSpec(shape, lambda i: (0, 0))
    streamed = lambda shape: pl.BlockSpec(shape, lambda i: (i, 0))

    flops = 2 * n_pad * h * (h + ep + h2)
    bytes_accessed = (x2.size * 2
                      + (w1b.size + w2b.size + wi1b.size) * 2
                      + (b1_2d.size + b2m.size + bi1_2d.size
                         + wi2_row.size + 1) * 4
                      + n_pad * (ep + 2 * kp) * 4)
    cost = pl.CostEstimate(flops=flops,
                           transcendentals=n_pad * (ep + 1),
                           bytes_accessed=bytes_accessed)

    probs_pad, idx_pad, aux = pl.pallas_call(
        kernel,
        out_shape=(
            jax.ShapeDtypeStruct((n_pad, ep), jnp.float32),
            jax.ShapeDtypeStruct((n_pad, kp), jnp.int32),
            jax.ShapeDtypeStruct((n_pad, kp), jnp.float32),
        ),
        grid=grid,
        in_specs=[
            streamed((tile_n, h)),     # x tile
            resident((h, h)),          # router w1
            resident((1, h)),          # router b1
            resident((h, ep)),         # router w2 (1/T folded, expert-padded)
            resident((1, ep)),         # b2/T + expert mask (+ -1e9 pads)
            resident((h, h2)),         # importance w1
            resident((1, h2)),         # importance b1
            resident((1, h2)),         # importance w2 (row vector)
            resident((1, 1)),          # importance b2
        ],
        out_specs=(
            streamed((tile_n, ep)),
            streamed((tile_n, kp)),
            streamed((tile_n, kp)),
        ),
        compiler_params=pltpu.CompilerParams(
            dimension_semantics=("parallel",)),
        cost_estimate=cost,
    )(x2, w1b, b1_2d, w2b, b2m, wi1b, bi1_2d, wi2_row, bi2_2d)

    routing_weights = probs_pad[:n, :e].reshape(b, s, e)
    expert_indices = idx_pad[:n, :top_k].reshape(b, s, top_k)
    top_k_weights = aux[:n, :top_k].reshape(b, s, top_k)
    importance = aux[:n, top_k:top_k + 1].reshape(b, s, 1)
    return routing_weights, expert_indices, top_k_weights, importance


def init_params(key, hidden_size, num_experts):
    """Deterministic synthetic init (uniform, PyTorch-Linear-like bounds)."""
    h2 = hidden_size // 2
    ks = jax.random.split(key, 8)
    b_h = 1.0 / (hidden_size ** 0.5)
    b_h2 = 1.0 / (h2 ** 0.5)
    u = lambda k, shape, bound: jax.random.uniform(k, shape, jnp.float32,
                                                   -bound, bound)
    return {
        "w1": u(ks[0], (hidden_size, hidden_size), b_h),
        "b1": u(ks[1], (hidden_size,), b_h),
        "w2": u(ks[2], (hidden_size, num_experts), b_h),
        "b2": u(ks[3], (num_experts,), b_h),
        "wi1": u(ks[4], (hidden_size, h2), b_h),
        "bi1": u(ks[5], (h2,), b_h),
        "wi2": u(ks[6], (h2, 1), b_h2),
        "bi2": u(ks[7], (1,), b_h2),
    }


if __name__ == "__main__":
    B, S, H, E, K = 2, 8, 32, 8, 2
    key = jax.random.PRNGKey(0)
    kx, kp, km = jax.random.split(key, 3)

    x = jax.random.normal(kx, (B, S, H), jnp.float32)
    params = init_params(kp, H, E)
    # Optional availability mask (0 = available, -1e9 = masked out).
    expert_mask = jnp.where(jax.random.bernoulli(km, 0.9, (E,)), 0.0, -1e9)

    routing_weights, expert_indices, top_k_weights, importance = \
        importance_aware_router_forward(x, params, top_k=K, temperature=1.0,
                                        expert_mask=expert_mask)

    jax.block_until_ready(
        (routing_weights, expert_indices, top_k_weights, importance))

    assert routing_weights.shape == (B, S, E)
    assert expert_indices.shape == (B, S, K)
    assert top_k_weights.shape == (B, S, K)
    assert importance.shape == (B, S, 1)
    print("KERNEL_OK")
</pallas_src>

<mosaic_0001>
module attributes {stable_mosaic.version = 11 : i64} {
  func.func @_router_kernel(%arg0: i32, %arg1: memref<16x32xbf16, #tpu.memory_space<vmem>>, %arg2: memref<32x32xbf16, #tpu.memory_space<vmem>>, %arg3: memref<1x32xf32, #tpu.memory_space<vmem>>, %arg4: memref<32x128xbf16, #tpu.memory_space<vmem>>, %arg5: memref<1x128xf32, #tpu.memory_space<vmem>>, %arg6: memref<32x16xbf16, #tpu.memory_space<vmem>>, %arg7: memref<1x16xf32, #tpu.memory_space<vmem>>, %arg8: memref<1x16xf32, #tpu.memory_space<vmem>>, %arg9: memref<1x1xf32, #tpu.memory_space<vmem>>, %arg10: memref<16x128xf32, #tpu.memory_space<vmem>>, %arg11: memref<16x128xi32, #tpu.memory_space<vmem>>, %arg12: memref<16x128xf32, #tpu.memory_space<vmem>>) attributes {dimension_semantics = [#tpu.dimension_semantics<parallel>], iteration_bounds = array<i64: 1>, scalar_prefetch = 0 : i64, scratch_operands = 0 : i64, tpu.core_type = #tpu.core_type<tc>, window_params = [{transform_indices = @transform_0, window_bounds = array<i64: 16, 32>}, {pipeline_mode = #tpu.pipeline_mode<synchronous>, transform_indices = @transform_1, window_bounds = array<i64: 32, 32>}, {pipeline_mode = #tpu.pipeline_mode<synchronous>, transform_indices = @transform_2, window_bounds = array<i64: 1, 32>}, {pipeline_mode = #tpu.pipeline_mode<synchronous>, transform_indices = @transform_3, window_bounds = array<i64: 32, 128>}, {pipeline_mode = #tpu.pipeline_mode<synchronous>, transform_indices = @transform_4, window_bounds = array<i64: 1, 128>}, {pipeline_mode = #tpu.pipeline_mode<synchronous>, transform_indices = @transform_5, window_bounds = array<i64: 32, 16>}, {pipeline_mode = #tpu.pipeline_mode<synchronous>, transform_indices = @transform_6, window_bounds = array<i64: 1, 16>}, {pipeline_mode = #tpu.pipeline_mode<synchronous>, transform_indices = @transform_7, window_bounds = array<i64: 1, 16>}, {pipeline_mode = #tpu.pipeline_mode<synchronous>, transform_indices = @transform_8, window_bounds = array<i64: 1, 1>}, {transform_indices = @transform_9, window_bounds = array<i64: 16, 128>}, {transform_indices = @transform_10, window_bounds = array<i64: 16, 128>}, {transform_indices = @transform_11, window_bounds = array<i64: 16, 128>}]} {
    %c0 = arith.constant 0 : index
    %c0_0 = arith.constant 0 : index
    %0 = vector.load %arg1[%c0, %c0_0] : memref<16x32xbf16, #tpu.memory_space<vmem>>, vector<16x32xbf16>
    %c0_1 = arith.constant 0 : index
    %c0_2 = arith.constant 0 : index
    %1 = vector.load %arg2[%c0_1, %c0_2] : memref<32x32xbf16, #tpu.memory_space<vmem>>, vector<32x32xbf16>
    %cst = arith.constant dense<0.000000e+00> : vector<16x32xf32>
    %2 = tpu.matmul %0, %1, %cst {dimension_numbers = #tpu.dot_dimension_numbers<[1], [0], [0], [1], [0, 0, 1, 1], [], []>} : vector<16x32xbf16>, vector<32x32xbf16>, vector<16x32xf32> -> vector<16x32xf32>
    %c0_3 = arith.constant 0 : index
    %c0_4 = arith.constant 0 : index
    %3 = vector.load %arg3[%c0_3, %c0_4] : memref<1x32xf32, #tpu.memory_space<vmem>>, vector<1x32xf32>
    %4 = vector.broadcast %3 : vector<1x32xf32> to vector<16x32xf32>
    %5 = arith.addf %2, %4 : vector<16x32xf32>
    %cst_5 = arith.constant 0.000000e+00 : f32
    %6 = vector.broadcast %cst_5 : f32 to vector<16x32xf32>
    %7 = arith.maximumf %5, %6 : vector<16x32xf32>
    %8 = arith.truncf %7 : vector<16x32xf32> to vector<16x32xbf16>
    %c0_6 = arith.constant 0 : index
    %c0_7 = arith.constant 0 : index
    %9 = vector.load %arg4[%c0_6, %c0_7] : memref<32x128xbf16, #tpu.memory_space<vmem>>, vector<32x128xbf16>
    %cst_8 = arith.constant dense<0.000000e+00> : vector<16x128xf32>
    %10 = tpu.matmul %8, %9, %cst_8 {dimension_numbers = #tpu.dot_dimension_numbers<[1], [0], [0], [1], [0, 0, 1, 1], [], []>} : vector<16x32xbf16>, vector<32x128xbf16>, vector<16x128xf32> -> vector<16x128xf32>
    %c0_9 = arith.constant 0 : index
    %c0_10 = arith.constant 0 : index
    %11 = vector.load %arg5[%c0_9, %c0_10] : memref<1x128xf32, #tpu.memory_space<vmem>>, vector<1x128xf32>
    %12 = vector.broadcast %11 : vector<1x128xf32> to vector<16x128xf32>
    %13 = arith.addf %10, %12 : vector<16x128xf32>
    %cst_11 = arith.constant dense<0xFF800000> : vector<16xf32>
    %14 = vector.multi_reduction <maximumf>, %13, %cst_11 [1] : vector<16x128xf32> to vector<16xf32>
    %15 = vector.shape_cast %14 : vector<16xf32> to vector<16x1xf32>
    %16 = vector.broadcast %15 : vector<16x1xf32> to vector<16x128xf32>
    %17 = arith.subf %13, %16 : vector<16x128xf32>
    %18 = math.exp %17 : vector<16x128xf32>
    %cst_12 = arith.constant dense<0.000000e+00> : vector<16xf32>
    %19 = vector.multi_reduction <add>, %18, %cst_12 [1] : vector<16x128xf32> to vector<16xf32>
    %20 = vector.shape_cast %19 : vector<16xf32> to vector<16x1xf32>
    %21 = tpu.reciprocal %20 {approx = true} : vector<16x1xf32> -> vector<16x1xf32>
    %22 = vector.broadcast %21 : vector<16x1xf32> to vector<16x128xf32>
    %23 = arith.mulf %18, %22 : vector<16x128xf32>
    %c0_13 = arith.constant 0 : index
    %c0_14 = arith.constant 0 : index
    %24 = vector.load %arg6[%c0_13, %c0_14] : memref<32x16xbf16, #tpu.memory_space<vmem>>, vector<32x16xbf16>
    %cst_15 = arith.constant dense<0.000000e+00> : vector<16x16xf32>
    %25 = tpu.matmul %0, %24, %cst_15 {dimension_numbers = #tpu.dot_dimension_numbers<[1], [0], [0], [1], [0, 0, 1, 1], [], []>} : vector<16x32xbf16>, vector<32x16xbf16>, vector<16x16xf32> -> vector<16x16xf32>
    %c0_16 = arith.constant 0 : index
    %c0_17 = arith.constant 0 : index
    %26 = vector.load %arg7[%c0_16, %c0_17] : memref<1x16xf32, #tpu.memory_space<vmem>>, vector<1x16xf32>
    %27 = vector.broadcast %26 : vector<1x16xf32> to vector<16x16xf32>
    %28 = arith.addf %25, %27 : vector<16x16xf32>
    %cst_18 = arith.constant 0.000000e+00 : f32
    %29 = vector.broadcast %cst_18 : f32 to vector<16x16xf32>
    %30 = arith.maximumf %28, %29 : vector<16x16xf32>
    %c0_19 = arith.constant 0 : index
    %c0_20 = arith.constant 0 : index
    %31 = vector.load %arg8[%c0_19, %c0_20] : memref<1x16xf32, #tpu.memory_space<vmem>>, vector<1x16xf32>
    %32 = vector.broadcast %31 : vector<1x16xf32> to vector<16x16xf32>
    %33 = arith.mulf %30, %32 : vector<16x16xf32>
    %cst_21 = arith.constant dense<0.000000e+00> : vector<16xf32>
    %34 = vector.multi_reduction <add>, %33, %cst_21 [1] : vector<16x16xf32> to vector<16xf32>
    %35 = vector.shape_cast %34 : vector<16xf32> to vector<16x1xf32>
    %c0_22 = arith.constant 0 : index
    %c0_23 = arith.constant 0 : index
    %36 = vector.load %arg9[%c0_22, %c0_23] : memref<1x1xf32, #tpu.memory_space<vmem>>, vector<1x1xf32>
    %37 = vector.broadcast %36 : vector<1x1xf32> to vector<16x1xf32>
    %38 = arith.addf %35, %37 : vector<16x1xf32>
    %cst_24 = arith.constant 0.000000e+00 : f32
    %39 = vector.broadcast %cst_24 : f32 to vector<16x1xf32>
    %40 = arith.subf %39, %38 : vector<16x1xf32>
    %41 = math.exp %40 : vector<16x1xf32>
    %cst_25 = arith.constant 1.000000e+00 : f32
    %42 = vector.broadcast %cst_25 : f32 to vector<16x1xf32>
    %43 = arith.addf %42, %41 : vector<16x1xf32>
    %44 = tpu.reciprocal %43 : vector<16x1xf32> -> vector<16x1xf32>
    %45 = vector.broadcast %44 : vector<16x1xf32> to vector<16x128xf32>
    %46 = arith.mulf %23, %45 : vector<16x128xf32>
    %cst_26 = arith.constant dense<0.000000e+00> : vector<16xf32>
    %47 = vector.multi_reduction <add>, %46, %cst_26 [1] : vector<16x128xf32> to vector<16xf32>
    %48 = vector.shape_cast %47 : vector<16xf32> to vector<16x1xf32>
    %49 = tpu.reciprocal %48 {approx = true} : vector<16x1xf32> -> vector<16x1xf32>
    %50 = vector.broadcast %49 : vector<16x1xf32> to vector<16x128xf32>
    %51 = arith.mulf %46, %50 : vector<16x128xf32>
    %c0_27 = arith.constant 0 : index
    %c0_28 = arith.constant 0 : index
    %52 = vector.load %arg10[%c0_27, %c0_28] : memref<16x128xf32, #tpu.memory_space<vmem>>, vector<16x128xf32>
    tpu.vector_store %arg10[%c0_27, %c0_28], %51 {strides = array<i32>} : memref<16x128xf32, #tpu.memory_space<vmem>>, vector<16x128xf32>,
    %53 = tpu.iota {dimensions = array<i32: 1>} : vector<16x128xi32>
    %cst_29 = arith.constant dense<0xFF800000> : vector<16xf32>
    %54 = vector.multi_reduction <maximumf>, %23, %cst_29 [1] : vector<16x128xf32> to vector<16xf32>
    %55 = vector.shape_cast %54 : vector<16xf32> to vector<16x1xf32>
    %56 = vector.broadcast %55 : vector<16x1xf32> to vector<16x128xf32>
    %57 = arith.cmpf oeq, %23, %56 : vector<16x128xf32>
    %c128_i32 = arith.constant 128 : i32
    %58 = vector.broadcast %c128_i32 : i32 to vector<16x128xi32>
    %59 = arith.select %57, %53, %58 : vector<16x128xi1>, vector<16x128xi32>
    %cst_30 = arith.constant dense<2147483647> : vector<16xi32>
    %60 = vector.multi_reduction <minsi>, %59, %cst_30 [1] : vector<16x128xi32> to vector<16xi32>
    %61 = vector.shape_cast %60 : vector<16xi32> to vector<16x1xi32>
    %62 = vector.broadcast %61 : vector<16x1xi32> to vector<16x128xi32>
    %63 = arith.cmpi eq, %53, %62 : vector<16x128xi32>
    %cst_31 = arith.constant 0xFF800000 : f32
    %64 = vector.broadcast %cst_31 : f32 to vector<16x128xf32>
    %65 = arith.select %63, %64, %23 : vector<16x128xi1>, vector<16x128xf32>
    %cst_32 = arith.constant dense<0xFF800000> : vector<16xf32>
    %66 = vector.multi_reduction <maximumf>, %65, %cst_32 [1] : vector<16x128xf32> to vector<16xf32>
    %67 = vector.shape_cast %66 : vector<16xf32> to vector<16x1xf32>
    %68 = vector.broadcast %67 : vector<16x1xf32> to vector<16x128xf32>
    %69 = arith.cmpf oeq, %65, %68 : vector<16x128xf32>
    %c128_i32_33 = arith.constant 128 : i32
    %70 = vector.broadcast %c128_i32_33 : i32 to vector<16x128xi32>
    %71 = arith.select %69, %53, %70 : vector<16x128xi1>, vector<16x128xi32>
    %cst_34 = arith.constant dense<2147483647> : vector<16xi32>
    %72 = vector.multi_reduction <minsi>, %71, %cst_34 [1] : vector<16x128xi32> to vector<16xi32>
    %73 = vector.shape_cast %72 : vector<16xi32> to vector<16x1xi32>
    %74 = arith.addf %55, %67 : vector<16x1xf32>
    %75 = tpu.reciprocal %74 {approx = true} : vector<16x1xf32> -> vector<16x1xf32>
    %76 = tpu.iota {dimensions = array<i32: 1>} : vector<16x128xi32>
    %c0_i32 = arith.constant 0 : i32
    %77 = vector.broadcast %c0_i32 : i32 to vector<16x128xi32>
    %78 = vector.shape_cast %44 : vector<16x1xf32> to vector<16x1xf32>
    %79 = vector.broadcast %78 : vector<16x1xf32> to vector<16x128xf32>
    %c0_i32_35 = arith.constant 0 : i32
    %80 = vector.broadcast %c0_i32_35 : i32 to vector<16x128xi32>
    %81 = arith.cmpi eq, %76, %80 : vector<16x128xi32>
    %82 = vector.shape_cast %61 : vector<16x1xi32> to vector<16x1xi32>
    %83 = vector.broadcast %82 : vector<16x1xi32> to vector<16x128xi32>
    %84 = arith.select %81, %83, %77 : vector<16x128xi1>, vector<16x128xi32>
    %c0_i32_36 = arith.constant 0 : i32
    %85 = vector.broadcast %c0_i32_36 : i32 to vector<16x128xi32>
    %86 = arith.cmpi eq, %76, %85 : vector<16x128xi32>
    %87 = arith.mulf %55, %75 : vector<16x1xf32>
    %88 = vector.shape_cast %87 : vector<16x1xf32> to vector<16x1xf32>
    %89 = vector.broadcast %88 : vector<16x1xf32> to vector<16x128xf32>
    %90 = arith.select %86, %89, %79 : vector<16x128xi1>, vector<16x128xf32>
    %c1_i32 = arith.constant 1 : i32
    %91 = vector.broadcast %c1_i32 : i32 to vector<16x128xi32>
    %92 = arith.cmpi eq, %76, %91 : vector<16x128xi32>
    %93 = vector.shape_cast %73 : vector<16x1xi32> to vector<16x1xi32>
    %94 = vector.broadcast %93 : vector<16x1xi32> to vector<16x128xi32>
    %95 = arith.select %92, %94, %84 : vector<16x128xi1>, vector<16x128xi32>
    %c1_i32_37 = arith.constant 1 : i32
    %96 = vector.broadcast %c1_i32_37 : i32 to vector<16x128xi32>
    %97 = arith.cmpi eq, %76, %96 : vector<16x128xi32>
    %98 = arith.mulf %67, %75 : vector<16x1xf32>
    %99 = vector.shape_cast %98 : vector<16x1xf32> to vector<16x1xf32>
    %100 = vector.broadcast %99 : vector<16x1xf32> to vector<16x128xf32>
    %101 = arith.select %97, %100, %90 : vector<16x128xi1>, vector<16x128xf32>
    %c0_38 = arith.constant 0 : index
    %c0_39 = arith.constant 0 : index
    %102 = vector.load %arg11[%c0_38, %c0_39] : memref<16x128xi32, #tpu.memory_space<vmem>>, vector<16x128xi32>
    tpu.vector_store %arg11[%c0_38, %c0_39], %95 {strides = array<i32>} : memref<16x128xi32, #tpu.memory_space<vmem>>, vector<16x128xi32>,
    %c0_40 = arith.constant 0 : index
    %c0_41 = arith.constant 0 : index
    %103 = vector.load %arg12[%c0_40, %c0_41] : memref<16x128xf32, #tpu.memory_space<vmem>>, vector<16x128xf32>
    tpu.vector_store %arg12[%c0_40, %c0_41], %101 {strides = array<i32>} : memref<16x128xf32, #tpu.memory_space<vmem>>, vector<16x128xf32>,
    return
  }
  func.func @transform_0(%arg0: i32) -> (i32, i32) {
    %c0_i32 = arith.constant 0 : i32
    %c0_i32_0 = arith.constant 0 : i32
    return %arg0, %c0_i32 : i32, i32
  }
  func.func @transform_1(%arg0: i32) -> (i32, i32) {
    %c0_i32 = arith.constant 0 : i32
    %c0_i32_0 = arith.constant 0 : i32
    %c0_i32_1 = arith.constant 0 : i32
    return %c0_i32, %c0_i32_0 : i32, i32
  }
  func.func @transform_2(%arg0: i32) -> (i32, i32) {
    %c0_i32 = arith.constant 0 : i32
    %c0_i32_0 = arith.constant 0 : i32
    %c0_i32_1 = arith.constant 0 : i32
    return %c0_i32, %c0_i32_0 : i32, i32
  }
  func.func @transform_3(%arg0: i32) -> (i32, i32) {
    %c0_i32 = arith.constant 0 : i32
    %c0_i32_0 = arith.constant 0 : i32
    %c0_i32_1 = arith.constant 0 : i32
    return %c0_i32, %c0_i32_0 : i32, i32
  }
  func.func @transform_4(%arg0: i32) -> (i32, i32) {
    %c0_i32 = arith.constant 0 : i32
    %c0_i32_0 = arith.constant 0 : i32
    %c0_i32_1 = arith.constant 0 : i32
    return %c0_i32, %c0_i32_0 : i32, i32
  }
  func.func @transform_5(%arg0: i32) -> (i32, i32) {
    %c0_i32 = arith.constant 0 : i32
    %c0_i32_0 = arith.constant 0 : i32
    %c0_i32_1 = arith.constant 0 : i32
    return %c0_i32, %c0_i32_0 : i32, i32
  }
  func.func @transform_6(%arg0: i32) -> (i32, i32) {
    %c0_i32 = arith.constant 0 : i32
    %c0_i32_0 = arith.constant 0 : i32
    %c0_i32_1 = arith.constant 0 : i32
    return %c0_i32, %c0_i32_0 : i32, i32
  }
  func.func @transform_7(%arg0: i32) -> (i32, i32) {
    %c0_i32 = arith.constant 0 : i32
    %c0_i32_0 = arith.constant 0 : i32
    %c0_i32_1 = arith.constant 0 : i32
    return %c0_i32, %c0_i32_0 : i32, i32
  }
  func.func @transform_8(%arg0: i32) -> (i32, i32) {
    %c0_i32 = arith.constant 0 : i32
    %c0_i32_0 = arith.constant 0 : i32
    %c0_i32_1 = arith.constant 0 : i32
    return %c0_i32, %c0_i32_0 : i32, i32
  }
  func.func @transform_9(%arg0: i32) -> (i32, i32) {
    %c0_i32 = arith.constant 0 : i32
    %c0_i32_0 = arith.constant 0 : i32
    return %arg0, %c0_i32 : i32, i32
  }
  func.func @transform_10(%arg0: i32) -> (i32, i32) {
    %c0_i32 = arith.constant 0 : i32
    %c0_i32_0 = arith.constant 0 : i32
    return %arg0, %c0_i32 : i32, i32
  }
  func.func @transform_11(%arg0: i32) -> (i32, i32) {
    %c0_i32 = arith.constant 0 : i32
    %c0_i32_0 = arith.constant 0 : i32
    return %arg0, %c0_i32 : i32, i32
  }
}

</mosaic_0001>

<llo_original>
// kernel: tpu_custom_call.1
$region0: #{tpu_custom_call.1}
  #allocation0 [shape = 'u32[]', space=smem, size = 0x4, offset = 0x4, fixed_abs, tag = 'smem constant byte address 0x4 - core index']
  #allocation1 [shape = 'u32[72,128]{1,0:T(1,128)}', space=vmem, size = 0x9000, scoped, tag = 'internal scratch']
  #allocation2 [shape = 'f32[1,1]{1,0:T(1,128)S(1)}', space=vmem, size = 0x200, scoped, tag = 'scoped memory for tpu_custom_call.1']
  %s0 = inlined_call_operand.vmem [shape: bf16[16,32], index: 0, kind: input, shape index: {}]
  %s1 = inlined_call_operand.vmem [shape: bf16[32,32], index: 1, kind: input, shape index: {}]
  %s2 = inlined_call_operand.vmem [shape: f32[1,32], index: 2, kind: input, shape index: {}]
  %s3 = inlined_call_operand.hbm [shape: bf16[32,128], index: 3, kind: input, shape index: {}]
  %s4 = inlined_call_operand.vmem [shape: f32[1,128], index: 4, kind: input, shape index: {}]
  %s5 = inlined_call_operand.vmem [shape: bf16[32,16], index: 5, kind: input, shape index: {}]
  %s6 = inlined_call_operand.vmem [shape: f32[1,16], index: 6, kind: input, shape index: {}]
  %s7 = inlined_call_operand.vmem [shape: f32[1,16], index: 7, kind: input, shape index: {}]
  %s8 = inlined_call_operand.<no memory space> [shape: f32[1,1], index: 8, kind: input, shape index: {}]
  %s9 = inlined_call_operand.hbm [shape: f32[16,128], index: 9, kind: output, shape index: {0}]
  %s10 = inlined_call_operand.hbm [shape: s32[16,128], index: 10, kind: output, shape index: {1}]
  %s11 = inlined_call_operand.hbm [shape: f32[16,128], index: 11, kind: output, shape index: {2}]
  %12 = xla_tuple %s9, %s10, %s11
  %s13 = sld [smem:[#allocation0]]
  $region66: #{tpu_custom_call.1} parent=0
    _
  %s15 = ssub.s32 1, %s13
  %s16 = scalar_select 0, %s15, %s13
  %v17 = vstv %s8
  %18 = vst [vmem:[#allocation2] sm:$0x1] %v17
  $region1: #{tpu_custom_call.1} parent=0
    #allocation3 [shape = 'u8[8192]{0}', space=vmem, size = 0x2000, scoped, tag = 'input window, operand 3, single buffered']
    #allocation4 [shape = 's32[1]{0}', space=sflag, size = 0x4, scoped, tag = 'scoped memory for tpu_custom_call.1']
    #allocation5 [shape = 's32[1]{0}', space=sflag, size = 0x4, scoped, tag = 'scoped memory for tpu_custom_call.1']
    #allocation6 [shape = 'u8[8192]{0}', space=vmem, size = 0x2000, scoped, tag = 'output window, operand 0, single buffered']
    #allocation7 [shape = 'u8[8192]{0}', space=vmem, size = 0x2000, scoped, tag = 'output window, operand 1, single buffered']
    #allocation8 [shape = 's32[1]{0}', space=sflag, size = 0x4, scoped, tag = 'scoped memory for tpu_custom_call.1']
    #allocation9 [shape = 'u8[8192]{0}', space=vmem, size = 0x2000, scoped, tag = 'output window, operand 2, single buffered']
    %19 = vsyncpa [#allocation4], 0
    %20 = vsyncpa [#allocation5], 0
    %21 = vsyncpa [#allocation8], 0
    // Predicated region
    $region2: #{tpu_custom_call.1} parent=1 // pred_check
      _
    $region3: #{tpu_custom_call.1} parent=1 // pred_check_branch
      %23 = sbr.rel (0) target = $region5
    $region4: #{tpu_custom_call.1} parent=1 // pred_region
      _
    $region5: #{tpu_custom_call.1} parent=1 // pred_fallthru
      _
    // Predicated region
    $region6: #{tpu_custom_call.1} parent=1 // pred_check
      _
    $region7: #{tpu_custom_call.1} parent=1 // pred_check_branch
      %25 = sbr.rel (0) target = $region9
    $region8: #{tpu_custom_call.1} parent=1 // pred_region
      _
    $region9: #{tpu_custom_call.1} parent=1 // pred_fallthru
      _
    // Predicated region
    $region10: #{tpu_custom_call.1} parent=1 // pred_check
      _
    $region11: #{tpu_custom_call.1} parent=1 // pred_check_branch
      %27 = sbr.rel (0) target = $region13
    $region12: #{tpu_custom_call.1} parent=1 // pred_region
      _
    $region13: #{tpu_custom_call.1} parent=1 // pred_fallthru
      _
    // Predicated region
    $region14: #{tpu_custom_call.1} parent=1 // pred_check
      _
    $region15: #{tpu_custom_call.1} parent=1 // pred_check_branch
      %29 = sbr.rel (0) target = $region17
    $region16: #{tpu_custom_call.1} parent=1 // pred_region
      %31 = vsyncadd [#allocation4], 0
      %s32 = sshll.u32 %s3, 4
      %s33 = int_to_ptr.hbm [resolvable:$true] %s32
      %s34 = sshll.u32 [#allocation3], 4
      %s35 = int_to_ptr.vmem [resolvable:$true] %s34
      %40 = dma.hbm_to_vmem [thread:$0]  %s33, 256, %s35, [#allocation4], 64, 64, 4
    $region17: #{tpu_custom_call.1} parent=1 // pred_fallthru
      _
    // Predicated region
    $region18: #{tpu_custom_call.1} parent=1 // pred_check
      _
    $region19: #{tpu_custom_call.1} parent=1 // pred_check_branch
      %42 = sbr.rel (0) target = $region21
    $region20: #{tpu_custom_call.1} parent=1 // pred_region
      _
    $region21: #{tpu_custom_call.1} parent=1 // pred_fallthru
      _
    // Predicated region
    $region22: #{tpu_custom_call.1} parent=1 // pred_check
      _
    $region23: #{tpu_custom_call.1} parent=1 // pred_check_branch
      %44 = sbr.rel (0) target = $region25
    $region24: #{tpu_custom_call.1} parent=1 // pred_region
      _
    $region25: #{tpu_custom_call.1} parent=1 // pred_fallthru
      _
    // Predicated region
    $region26: #{tpu_custom_call.1} parent=1 // pred_check
      _
    $region27: #{tpu_custom_call.1} parent=1 // pred_check_branch
      %46 = sbr.rel (0) target = $region29
    $region28: #{tpu_custom_call.1} parent=1 // pred_region
      _
    $region29: #{tpu_custom_call.1} parent=1 // pred_fallthru
      _
    // Predicated region
    $region30: #{tpu_custom_call.1} parent=1 // pred_check
      _
    $region31: #{tpu_custom_call.1} parent=1 // pred_check_branch
      %48 = sbr.rel (0) target = $region33
    $region32: #{tpu_custom_call.1} parent=1 // pred_region
      _
    $region33: #{tpu_custom_call.1} parent=1 // pred_fallthru
      _
    // Predicated region
    $region34: #{tpu_custom_call.1} parent=1 // pred_check
      _
    $region35: #{tpu_custom_call.1} parent=1 // pred_check_branch
      %50 = sbr.rel (0) target = $region37
    $region36: #{tpu_custom_call.1} parent=1 // pred_region
      _
    $region37: #{tpu_custom_call.1} parent=1 // pred_fallthru
      _
    // Predicated region
    $region38: #{tpu_custom_call.1} parent=1 // pred_check
      _
    $region39: #{tpu_custom_call.1} parent=1 // pred_check_branch
      %52 = sbr.rel (0) target = $region41
    $region40: #{tpu_custom_call.1} parent=1 // pred_region
      %54 = dma.done [#allocation4], 256
    $region41: #{tpu_custom_call.1} parent=1 // pred_fallthru
      _
    %v56 = vld [vmem:[%s0] sm:$0xf]
    %v57 = vld [vmem:[%s0 + $0x4] sm:$0xf]
    %v58 = vld [vmem:[%s1] sm:$0xf]
    %v59 = vld [vmem:[%s1 + $0x4] sm:$0xf]
    %v60 = vld [vmem:[%s1 + $0x8] sm:$0xf]
    %v61 = vld [vmem:[%s1 + $0xc] sm:$0xf]
    %v62 = vld [vmem:[%s2] sm:$0x1]
    %v64 = vperm.slane %v62, 0
    %v68 = vunpack.c.l.b16 %v56
    %v69 = vunpack.c.l.b16 %v57
    %v70 = vpack.c.b16 %v69, %v68
    %v75 = vunpack.c.l.b16 %v58
    %v76 = vunpack.c.l.b16 %v59
    %v77 = vunpack.c.l.b16 %v60
    %v78 = vunpack.c.l.b16 %v61
    %v79 = vpack.c.b16 %v76, %v75
    %v80 = vpack.c.b16 %v78, %v77
    %vm83 = vcmask 261120
    %v85 = vsel %vm83, %v70, 0
    %87 = vmatpush.bf16.msra.mxu0 0
    %88 = vmatpush.bf16.msra.mxu0 0
    %89 = vmatpush.bf16.msra.mxu0 0
    %90 = vmatpush.bf16.msra.mxu0 0
    %91 = vmatpush.bf16.msra.mxu0 0
    %92 = vmatpush.bf16.msra.mxu0 0
    %93 = vmatpush.bf16.msra.mxu0 %v80
    %94 = vmatpush.bf16.msra.mxu0 %v79
    %95 = vmatmul.bf16.gmra.mxu0 %v85
    %v96 = vpop.f32.mrf.mxu0
    %v97 = vadd.f32 %v64, %v96
    %v98 = vpop.f32.mrf.mxu0
    %v99 = vadd.f32 %v64, %v98
    %100 = vdwg.mxu0
    %v101 = vmax.f32 %v97, 0.0
    %v102 = vmax.f32 %v99, 0.0
    %v103 = vpack.c.bf16 %v102, %v101
    %v104 = vld [vmem:[#allocation3] sm:$0xf]
    %v105 = vld [vmem:[#allocation3 + $0x4] sm:$0xf]
    %v106 = vld [vmem:[#allocation3 + $0x8] sm:$0xf]
    %v107 = vld [vmem:[#allocation3 + $0xc] sm:$0xf]
    %v108 = vld [vmem:[%s4] sm:$0x1]
    %v110 = vperm.slane %v108, 0
    %v116 = vunpack.c.l.b16 %v104
    %v117 = vunpack.c.l.b16 %v105
    %v118 = vunpack.c.l.b16 %v106
    %v119 = vunpack.c.l.b16 %v107
    %v120 = vpack.c.b16 %v117, %v116
    %v121 = vpack.c.b16 %v119, %v118
    %v125 = vsel %vm83, %v103, 0
    %127 = vmatpush.bf16.msra.mxu0 0
    %128 = vmatpush.bf16.msra.mxu0 0
    %129 = vmatpush.bf16.msra.mxu0 0
    %130 = vmatpush.bf16.msra.mxu0 0
    %131 = vmatpush.bf16.msra.mxu0 0
    %132 = vmatpush.bf16.msra.mxu0 0
    %133 = vmatpush.bf16.msra.mxu0 %v121
    %134 = vmatpush.bf16.msra.mxu0 %v120
    %135 = vmatmul.bf16.gmra.mxu0 %v125
    %v136 = vpop.f32.mrf.mxu0
    %v137 = vadd.f32 %v110, %v136
    %v138 = vpop.f32.mrf.mxu0
    %v139 = vadd.f32 %v110, %v138
    %140 = vdwg.mxu0
    %141 = vmax.xlane.f32.xlu0 %v137
    %v142 = vpop.xlane.xlu0 %141
    %143 = vmax.xlane.f32.xlu0 %v139
    %v144 = vpop.xlane.xlu0 %143
    %v145 = vsub.f32 %v137, %v142
    %v146 = vsub.f32 %v139, %v144
    %v147 = vmul.f32 %v145, 1.442695
    %v148 = vpow.pop %v147
    %v149 = vmul.f32 %v146, 1.442695
    %v150 = vpow.pop %v149
    %151 = vadd.xlane.f32.xlu0 %v148
    %v152 = vpop.xlane.xlu0 %151
    %153 = vadd.xlane.f32.xlu0 %v150
    %v154 = vpop.xlane.xlu0 %153
    %v155 = vrcp.pop %v152
    %v156 = vrcp.pop %v154
    %v157 = vmul.f32 %v148, %v155
    %v158 = vmul.f32 %v150, %v156
    %v159 = vld [vmem:[%s5] sm:$0xf]
    %v160 = vld [vmem:[%s5 + $0x4] sm:$0xf]
    %v161 = vld [vmem:[%s5 + $0x8] sm:$0xf]
    %v162 = vld [vmem:[%s5 + $0xc] sm:$0xf]
    %v163 = vld [vmem:[%s6] sm:$0x1]
    %v165 = vperm.slane %v163, 0
    %v171 = vunpack.c.l.b16 %v159
    %v172 = vunpack.c.l.b16 %v160
    %v173 = vunpack.c.l.b16 %v161
    %v174 = vunpack.c.l.b16 %v162
    %v175 = vpack.c.b16 %v172, %v171
    %v176 = vpack.c.b16 %v174, %v173
    %179 = vmatpush.bf16.msra.mxu0 0
    %180 = vmatpush.bf16.msra.mxu0 0
    %181 = vmatpush.bf16.msra.mxu0 0
    %182 = vmatpush.bf16.msra.mxu0 0
    %183 = vmatpush.bf16.msra.mxu0 0
    %184 = vmatpush.bf16.msra.mxu0 0
    %185 = vmatpush.bf16.msra.mxu0 %v176
    %186 = vmatpush.bf16.msra.mxu0 %v175
    %187 = vmatmul.bf16.gmra.mxu0 %v85
    %v188 = vpop.f32.mrf.mxu0
    %v189 = vadd.f32 %v165, %v188
    %v190 = vpop.f32.mrf.mxu0
    %v191 = vadd.f32 %v165, %v190
    %192 = vdwg.mxu0
    %v193 = vmax.f32 %v189, 0.0
    %v194 = vmax.f32 %v191, 0.0
    %v195 = vld [vmem:[%s7] sm:$0x1]
    %v197 = vperm.slane %v195, 0
    %v199 = vmul.f32 %v193, %v197
    %v200 = vmul.f32 %v194, %v197
    %vm201 = vcmask 130048
    %v202 = vsel %vm201, %v199, 0.0
    %203 = vadd.xlane.f32.xlu0 %v202
    %v204 = vpop.xlane.xlu0 %203
    %v205 = vsel %vm201, %v200, 0.0
    %206 = vadd.xlane.f32.xlu0 %v205
    %v207 = vpop.xlane.xlu0 %206
    %v208 = vld [vmem:[#allocation2] sm:$0x1]
    %v210 = vperm.slane %v208, 0
    %v212 = vadd.f32 %v204, %v210
    %v213 = vadd.f32 %v207, %v210
    %v214 = vsub.f32 0.0, %v212
    %v215 = vsub.f32 0.0, %v213
    %v216 = vmul.f32 %v214, 1.442695
    %v217 = vpow.pop %v216
    %v218 = vmul.f32 %v215, 1.442695
    %v219 = vpow.pop %v218
    %v220 = vadd.f32 %v217, 1.0
    %v221 = vadd.f32 %v219, 1.0
    %v222 = vrcp.pop %v220
    %v223 = vmul.f32 %v220, %v222
    %v224 = vsub.f32 1.0, %v223
    %v225 = vmul.f32 %v222, %v224
    %v226 = vadd.f32 %v222, %v225
    %vm227 = vweird.f32 %v220
    %vm228 = vweird.f32 %v222
    %vm229 = vmor %vm227, %vm228
    %v230 = vsel %vm229, %v222, %v226
    %v231 = vand.u32 2147483647, %v220
    %vm232 = vcmp.eq.f32.partialorder %v231, 8.507059e+37
    %v233 = vand.u32 %v220, 2147483648
    %v234 = vor.u32 1.1754944e-38, %v233
    %v235 = vsel %vm232, %v234, %v230
    %v236 = vrcp.pop %v221
    %v237 = vmul.f32 %v221, %v236
    %v238 = vsub.f32 1.0, %v237
    %v239 = vmul.f32 %v236, %v238
    %v240 = vadd.f32 %v236, %v239
    %vm241 = vweird.f32 %v221
    %vm242 = vweird.f32 %v236
    %vm243 = vmor %vm241, %vm242
    %v244 = vsel %vm243, %v236, %v240
    %v245 = vand.u32 2147483647, %v221
    %vm246 = vcmp.eq.f32.partialorder %v245, 8.507059e+37
    %v247 = vand.u32 %v221, 2147483648
    %v248 = vor.u32 1.1754944e-38, %v247
    %v249 = vsel %vm246, %v248, %v244
    %251 = vset.pattern.permute.xlu0 0
    %252 = vperm.xlu0 %251, %v235
    %v253 = vpop.permute.xlu0 %252
    %256 = vset.pattern.permute.xlu0 0
    %257 = vperm.xlu0 %256, %v249
    %v258 = vpop.permute.xlu0 %257
    %v260 = vmul.f32 %v157, %v253
    %v261 = vmul.f32 %v158, %v258
    %262 = vadd.xlane.f32.xlu0 %v260
    %v263 = vpop.xlane.xlu0 %262
    %264 = vadd.xlane.f32.xlu0 %v261
    %v265 = vpop.xlane.xlu0 %264
    %v266 = vrcp.pop %v263
    %v267 = vrcp.pop %v265
    %v268 = vmul.f32 %v260, %v266
    %v269 = vmul.f32 %v261, %v267
    %270 = vst [vmem:[#allocation6] sm:$0xff] %v268
    %271 = vst [vmem:[#allocation6 + $0x8] sm:$0xff] %v269
    %v272 = vlaneseq
    %v273 = vand.u32 %v272, 127
    %274 = vmax.xlane.f32.xlu0 %v157
    %v275 = vpop.xlane.xlu0 %274
    %276 = vmax.xlane.f32.xlu0 %v158
    %v277 = vpop.xlane.xlu0 %276
    %vm278 = vcmp.eq.f32.partialorder %v157, %v275
    %vm279 = vcmp.eq.f32.partialorder %v158, %v277
    %v280 = vsel %vm278, %v273, 128
    %v281 = vsel %vm279, %v273, 128
    %v282 = vand.u32 %v280, 65535
    %v283 = vshra.s32 %v280, 16
    %v284 = vcvt.s32.f32 %v282
    %v285 = vcvt.s32.f32 %v283
    %286 = vmin.xlane.f32.xlu0 %v285
    %v287 = vpop.xlane.xlu0 %286
    %vm288 = vcmp.eq.f32.partialorder %v285, %v287
    %v289 = vsel %vm288, %v284, inf
    %290 = vmin.xlane.f32.xlu0 %v289
    %v291 = vpop.xlane.xlu0 %290
    %v292 = vcvt.f32.s32 %v291
    %v293 = vcvt.f32.s32 %v287
    %v294 = vshll.u32 %v293, 16
    %v295 = vadd.s32 %v294, %v292
    %v296 = vand.u32 %v281, 65535
    %v297 = vshra.s32 %v281, 16
    %v298 = vcvt.s32.f32 %v296
    %v299 = vcvt.s32.f32 %v297
    %300 = vmin.xlane.f32.xlu0 %v299
    %v301 = vpop.xlane.xlu0 %300
    %vm302 = vcmp.eq.f32.partialorder %v299, %v301
    %v303 = vsel %vm302, %v298, inf
    %304 = vmin.xlane.f32.xlu0 %v303
    %v305 = vpop.xlane.xlu0 %304
    %v306 = vcvt.f32.s32 %v305
    %v307 = vcvt.f32.s32 %v301
    %v308 = vshll.u32 %v307, 16
    %v309 = vadd.s32 %v308, %v306
    %vm310 = vcmp.eq.s32.totalorder %v273, %v295
    %vm311 = vcmp.eq.s32.totalorder %v273, %v309
    %v312 = vsel %vm310, -inf, %v157
    %v313 = vsel %vm311, -inf, %v158
    %314 = vmax.xlane.f32.xlu0 %v312
    %v315 = vpop.xlane.xlu0 %314
    %316 = vmax.xlane.f32.xlu0 %v313
    %v317 = vpop.xlane.xlu0 %316
    %vm318 = vcmp.eq.f32.partialorder %v312, %v315
    %vm319 = vcmp.eq.f32.partialorder %v313, %v317
    %v320 = vsel %vm318, %v273, 128
    %v321 = vsel %vm319, %v273, 128
    %v322 = vand.u32 %v320, 65535
    %v323 = vshra.s32 %v320, 16
    %v324 = vcvt.s32.f32 %v322
    %v325 = vcvt.s32.f32 %v323
    %326 = vmin.xlane.f32.xlu0 %v325
    %v327 = vpop.xlane.xlu0 %326
    %vm328 = vcmp.eq.f32.partialorder %v325, %v327
    %v329 = vsel %vm328, %v324, inf
    %330 = vmin.xlane.f32.xlu0 %v329
    %v331 = vpop.xlane.xlu0 %330
    %v332 = vcvt.f32.s32 %v331
    %v333 = vcvt.f32.s32 %v327
    %v334 = vshll.u32 %v333, 16
    %v335 = vadd.s32 %v334, %v332
    %v336 = vand.u32 %v321, 65535
    %v337 = vshra.s32 %v321, 16
    %v338 = vcvt.s32.f32 %v336
    %v339 = vcvt.s32.f32 %v337
    %340 = vmin.xlane.f32.xlu0 %v339
    %v341 = vpop.xlane.xlu0 %340
    %vm342 = vcmp.eq.f32.partialorder %v339, %v341
    %v343 = vsel %vm342, %v338, inf
    %344 = vmin.xlane.f32.xlu0 %v343
    %v345 = vpop.xlane.xlu0 %344
    %v346 = vcvt.f32.s32 %v345
    %v347 = vcvt.f32.s32 %v341
    %v348 = vshll.u32 %v347, 16
    %v349 = vadd.s32 %v348, %v346
    %v350 = vadd.f32 %v275, %v315
    %v351 = vadd.f32 %v277, %v317
    %v352 = vrcp.pop %v350
    %v353 = vrcp.pop %v351
    %vm354 = vcmp.eq.s32.totalorder %v273, 0
    %v355 = vsel %vm354, %v295, 0
    %v356 = vsel %vm354, %v309, 0
    %v357 = vmul.f32 %v275, %v352
    %v358 = vmul.f32 %v277, %v353
    %v359 = vsel %vm354, %v357, %v253
    %v360 = vsel %vm354, %v358, %v258
    %vm361 = vcmp.eq.s32.totalorder %v273, 1
    %v362 = vsel %vm361, %v335, %v355
    %v363 = vsel %vm361, %v349, %v356
    %v364 = vmul.f32 %v315, %v352
    %v365 = vmul.f32 %v317, %v353
    %v366 = vsel %vm361, %v364, %v359
    %v367 = vsel %vm361, %v365, %v360
    %368 = vst [vmem:[#allocation7] sm:$0xff] %v362
    %369 = vst [vmem:[#allocation7 + $0x8] sm:$0xff] %v363
    %370 = vst [vmem:[#allocation9] sm:$0xff] %v366
    %371 = vst [vmem:[#allocation9 + $0x8] sm:$0xff] %v367
    // Predicated region
    $region42: #{tpu_custom_call.1} parent=1 // pred_check
      _
    $region43: #{tpu_custom_call.1} parent=1 // pred_check_branch
      %373 = sbr.rel (0) target = $region45
    $region44: #{tpu_custom_call.1} parent=1 // pred_region
      %375 = vsyncadd [#allocation5], 0
      %s376 = sshll.u32 [#allocation6], 4
      %s377 = int_to_ptr.vmem [resolvable:$true] %s376
      %s378 = sshll.u32 %s9, 4
      %s379 = int_to_ptr.hbm [resolvable:$true] %s378
      %384 = dma.vmem_to_hbm [thread:$0]  %s377, 256, %s379, [#allocation5], 128, 128, 8
    $region45: #{tpu_custom_call.1} parent=1 // pred_fallthru
      _
    // Predicated region
    $region46: #{tpu_custom_call.1} parent=1 // pred_check
      _
    $region47: #{tpu_custom_call.1} parent=1 // pred_check_branch
      %386 = sbr.rel (0) target = $region49
    $region48: #{tpu_custom_call.1} parent=1 // pred_region
      %388 = vsyncadd [#allocation8], 0
      %s389 = sshll.u32 [#allocation7], 4
      %s390 = int_to_ptr.vmem [resolvable:$true] %s389
      %s391 = sshll.u32 %s10, 4
      %s392 = int_to_ptr.hbm [resolvable:$true] %s391
      %397 = dma.vmem_to_hbm [thread:$0]  %s390, 256, %s392, [#allocation8], 128, 128, 8
    $region49: #{tpu_custom_call.1} parent=1 // pred_fallthru
      _
    // Predicated region
    $region50: #{tpu_custom_call.1} parent=1 // pred_check
      _
    $region51: #{tpu_custom_call.1} parent=1 // pred_check_branch
      %399 = sbr.rel (0) target = $region53
    $region52: #{tpu_custom_call.1} parent=1 // pred_region
      %401 = vsyncadd [#allocation8], 0
      %s402 = sshll.u32 [#allocation9], 4
      %s403 = int_to_ptr.vmem [resolvable:$true] %s402
      %s404 = sshll.u32 %s11, 4
      %s405 = int_to_ptr.hbm [resolvable:$true] %s404
      %410 = dma.vmem_to_hbm [thread:$0]  %s403, 256, %s405, [#allocation8], 128, 128, 8
    $region53: #{tpu_custom_call.1} parent=1 // pred_fallthru
      _
    // Predicated region
    $region54: #{tpu_custom_call.1} parent=1 // pred_check
      _
    $region55: #{tpu_custom_call.1} parent=1 // pred_check_branch
      %412 = sbr.rel (0) target = $region57
    $region56: #{tpu_custom_call.1} parent=1 // pred_region
      %414 = dma.done [#allocation5], 256
    $region57: #{tpu_custom_call.1} parent=1 // pred_fallthru
      _
    // Predicated region
    $region58: #{tpu_custom_call.1} parent=1 // pred_check
      _
    $region59: #{tpu_custom_call.1} parent=1 // pred_check_branch
      %416 = sbr.rel (0) target = $region61
    $region60: #{tpu_custom_call.1} parent=1 // pred_region
      %418 = dma.done [#allocation8], 256
    $region61: #{tpu_custom_call.1} parent=1 // pred_fallthru
      _
    // Predicated region
    $region62: #{tpu_custom_call.1} parent=1 // pred_check
      _
    $region63: #{tpu_custom_call.1} parent=1 // pred_check_branch
      %420 = sbr.rel (0) target = $region65
    $region64: #{tpu_custom_call.1} parent=1 // pred_region
      %422 = dma.done [#allocation8], 256
    $region65: #{tpu_custom_call.1} parent=1 // pred_fallthru
      _
    %423 = vsyncpa [#allocation4], 1
    %424 = vsyncpa [#allocation5], 1
    %425 = vsyncpa [#allocation8], 1

</llo_original>
